<compile_context>
chip_gen: v6e
topology: v6e:2x2x1
jax: 0.10.0
libtpu: 0.0.40
codegen_flags: <defaults>
</compile_context>

<pallas_src>
import functools
import math

import jax
import jax.numpy as jnp
from jax import lax
from jax.experimental import pallas as pl
from jax.experimental.pallas import tpu as pltpu


def _hncl_kernel(imgs_ref, caps_ref, cmax_ref, diag_ref, rmax_out_ref, rmax_ref,
                 *, tm, tn, n, n_pad):
    i = pl.program_id(0)          # image (row) tile  -- "parallel" axis
    j = pl.program_id(1)          # caption (col) tile -- inner "arbitrary" axis
    nj = pl.num_programs(1)

    imgs = imgs_ref[...]          # (TM, D) native dtype -> MXU
    caps = caps_ref[...]          # (TN, D)

    # scores[r, c] = <imgs[r], caps[c]>, MXU matmul with f32 accumulation.
    scores = lax.dot_general(imgs, caps, (((1,), (1,)), ((), ())),
                             preferred_element_type=jnp.float32)      # (TM, TN)

    has_pad = (n_pad != n)        # static Python bool

    # Per-row-sweep init of the running row maximum (j is the inner axis).
    @pl.when(j == 0)
    def _():
        rmax_ref[...] = jnp.full(rmax_ref.shape, -jnp.inf, dtype=rmax_ref.dtype)

    if has_pad:
        # Masks only emitted when padding exists; tiny (1,TN)/(TM,1) iotas.
        valid_col = (j * tn + lax.broadcasted_iota(jnp.int32, (1, tn), 1)) < n
        valid_row = (i * tm + lax.broadcasted_iota(jnp.int32, (tm, 1), 0)) < n

    def _update_maxima(s):
        if has_pad:
            s_row = jnp.where(valid_col, s, -jnp.inf)   # drop padded captions
            s_col = jnp.where(valid_row, s, -jnp.inf)   # drop padded images
        else:
            s_row = s_col = s
        # hardest caption so far for each image row of this tile
        rmax_ref[...] = jnp.maximum(rmax_ref[...],
                                    jnp.max(s_row, axis=1, keepdims=True))
        # this row tile's contribution to the hardest image per caption
        cmax_ref[...] = jnp.max(s_col, axis=0, keepdims=True)

    # A tile holds diagonal entries iff its global row/col ranges overlap.
    is_diag = jnp.logical_and(j * tn < (i + 1) * tm, i * tm < (j + 1) * tn)

    @pl.when(is_diag)
    def _():
        grow = i * tm + lax.broadcasted_iota(jnp.int32, (tm, 1), 0)
        gcol = j * tn + lax.broadcasted_iota(jnp.int32, (1, tn), 1)
        eye = grow == gcol                                  # (TM, TN) broadcast
        # scores - 2*diag(diag)  ==  flip the sign of the diagonal entries.
        _update_maxima(jnp.where(eye, -scores, scores))
        # Diagonal extracted straight from the MXU-accumulated scores.
        diag_ref[...] = jnp.sum(jnp.where(eye, scores, 0.0),
                                axis=0, keepdims=True)      # (1, TN)

    @pl.when(jnp.logical_not(is_diag))
    def _():
        _update_maxima(scores)                              # no mask/select here
        diag_ref[...] = jnp.zeros(diag_ref.shape, dtype=diag_ref.dtype)

    # Finalize the per-row maxima after the whole caption sweep.
    @pl.when(j == nj - 1)
    def _():
        rmax_out_ref[...] = rmax_ref[...]


def _round_up(x, m):
    return (x + m - 1) // m * m


def _pick_tiles(n, d, itemsize):
    """Return (tile_m, tile_n, n_pad); dtype- and D-aware, v7x-VMEM-safe."""
    if n <= 256:
        return n, n, n                       # single tile, any N, no padding
    cap = _round_up(n, 128)
    tn = 128 if cap <= 1024 else 256         # caps tile (re-streamed per row sweep)
    budget = 40 * 1024 * 1024                # fits v7x's 64 MiB physical VMEM
    tm = tn
    cand = (min(cap, 2048) // tn) * tn       # imgs tile: as large as fits
    while cand >= tn:
        vmem = (2 * cand * d * itemsize      # imgs (double buffered)
                + 2 * tn * d * itemsize      # caps (double buffered)
                + 3 * cand * tn * 4          # scores tile + flipped/masked views
                + 4 * (cand + 3 * tn) * 4)   # scratch + small outputs
        if vmem <= budget:
            tm = cand
            break
        cand -= tn
    n_pad = _round_up(n, tm)                 # tm is a multiple of tn
    return tm, tn, n_pad


def hard_negative_contrastive_loss(imgs, caps, nmax=1, margin=0.2, *,
                                   tile_m=None, tile_n=None):
    """Pallas TPU implementation of HardNegativeContrastiveLoss.forward (nmax == 1)."""
    assert nmax == 1, "only nmax == 1 (module default) is implemented"
    assert imgs.ndim == 2 and imgs.shape == caps.shape
    n, d = imgs.shape
    margin = float(margin)

    if tile_m is None and tile_n is None:
        tm, tn, n_pad = _pick_tiles(n, d, imgs.dtype.itemsize)
    else:
        tm = int(tile_m if tile_m is not None else tile_n)
        tn = int(tile_n if tile_n is not None else tile_m)
        n_pad = _round_up(n, math.lcm(tm, tn))
    assert tn % 128 == 0 or tn == n_pad, "caption tile must be lane-aligned"
    assert tm % 8 == 0 or tm == n_pad, "image tile must be sublane-aligned"
    ni, nj = n_pad // tm, n_pad // tn

    if n_pad != n:
        pad = n_pad - n
        imgs_p = jnp.pad(imgs, ((0, pad), (0, 0)))
        caps_p = jnp.pad(caps, ((0, pad), (0, 0)))
    else:
        imgs_p, caps_p = imgs, caps

    kernel = functools.partial(_hncl_kernel, tm=tm, tn=tn, n=n, n_pad=n_pad)

    grid_spec = pltpu.PrefetchScalarGridSpec(
        num_scalar_prefetch=0,
        grid=(ni, nj),
        in_specs=[
            pl.BlockSpec((tm, d), lambda i, j: (i, 0)),   # imgs row tile
            pl.BlockSpec((tn, d), lambda i, j: (j, 0)),   # caps col tile
        ],
        out_specs=[
            # per-row-tile partial column maxima / diag rows, lane-dense (1, TN)
            pl.BlockSpec((None, 1, tn), lambda i, j: (i, 0, j)),
            pl.BlockSpec((None, 1, tn), lambda i, j: (i, 0, j)),
            # per-image row maxima, written once per row sweep
            pl.BlockSpec((tm, 1), lambda i, j: (i, 0)),
        ],
        scratch_shapes=[pltpu.VMEM((tm, 1), jnp.float32)],   # running row max
    )

    out_shapes = (
        jax.ShapeDtypeStruct((ni, 1, n_pad), jnp.float32),   # col max partials
        jax.ShapeDtypeStruct((ni, 1, n_pad), jnp.float32),   # diag partials
        jax.ShapeDtypeStruct((n_pad, 1), jnp.float32),       # row maxima
    )

    cost = pl.CostEstimate(
        flops=2 * n_pad * n_pad * d,
        transcendentals=0,
        bytes_accessed=imgs.dtype.itemsize * n_pad * d * (1 + ni)
        + 4 * (2 * ni * n_pad + n_pad),
    )

    cmax_p, diag_p, rmax_p = pl.pallas_call(
        kernel,
        out_shape=out_shapes,
        grid_spec=grid_spec,
        compiler_params=pltpu.CompilerParams(
            # i carries no cross-iteration state -> megacore-shardable on v7x.
            dimension_semantics=("parallel", "arbitrary"),
            vmem_limit_bytes=48 * 1024 * 1024,
        ),
        cost_estimate=cost,
    )(imgs_p, caps_p)

    # O(N) epilogue in plain JAX (negligible next to the O(N^2 D) kernel).
    col_max = jnp.max(cmax_p[:, 0, :n], axis=0)      # hardest image per caption
    diag = jnp.sum(diag_p[:, 0, :n], axis=0)         # exactly one row tile owns each entry
    row_max = rmax_p[:n, 0]                          # hardest caption per image
    neg_cap = jnp.sum(jnp.maximum(col_max + (margin - diag), 0.0))
    neg_img = jnp.sum(jnp.maximum(row_max + (margin - diag), 0.0))
    return neg_cap + neg_img


def _reference_loss(imgs, caps, nmax=1, margin=0.2):
    """Pure-JAX port of the PyTorch forward, for correctness checking."""
    scores = imgs @ caps.T
    diag = jnp.diag(scores)
    scores = scores - 2.0 * jnp.diag(diag)
    sorted_cap = -jnp.sort(-scores, axis=0)            # descending along dim 0
    sorted_img = -jnp.sort(-scores, axis=1)            # descending along dim 1
    max_c = sorted_cap[:nmax, :]
    max_i = sorted_img[:, :nmax]
    neg_cap = jnp.sum(jnp.maximum(max_c + (margin - diag)[None, :], 0.0))
    neg_img = jnp.sum(jnp.maximum(max_i + (margin - diag)[:, None], 0.0))
    return neg_cap + neg_img


if __name__ == "__main__":
    key = jax.random.PRNGKey(0)
    k1, k2, k3, k4, k5, k6, k7, k8 = jax.random.split(key, 8)

    def _norm(x):  # contrastive losses normally see unit-norm embeddings
        return x / jnp.linalg.norm(x, axis=1, keepdims=True)

    # 1) Tiny single-tile case: batch 8, hidden 32.
    imgs = _norm(jax.random.normal(k1, (8, 32), dtype=jnp.float32))
    caps = _norm(jax.random.normal(k2, (8, 32), dtype=jnp.float32))
    loss = jax.block_until_ready(hard_negative_contrastive_loss(imgs, caps))
    ref = _reference_loss(imgs, caps)
    assert jnp.allclose(loss, ref, rtol=1e-4, atol=1e-4), (loss, ref)

    # 2) Square 128x128 tiles with a padded tail (N=200 not a multiple of 128).
    imgs2 = _norm(jax.random.normal(k3, (200, 64), dtype=jnp.float32))
    caps2 = _norm(jax.random.normal(k4, (200, 64), dtype=jnp.float32))
    loss2 = jax.block_until_ready(
        hard_negative_contrastive_loss(imgs2, caps2, tile_m=128, tile_n=128))
    ref2 = _reference_loss(imgs2, caps2)
    assert jnp.allclose(loss2, ref2, rtol=1e-4, atol=1e-3), (loss2, ref2)

    # 3) Rectangular tiles (TM=256, TN=128) + padding: N=384 -> padded to 512.
    imgs3 = _norm(jax.random.normal(k5, (384, 64), dtype=jnp.float32))
    caps3 = _norm(jax.random.normal(k6, (384, 64), dtype=jnp.float32))
    loss3 = jax.block_until_ready(
        hard_negative_contrastive_loss(imgs3, caps3, tile_m=256, tile_n=128))
    ref3 = _reference_loss(imgs3, caps3)
    assert jnp.allclose(loss3, ref3, rtol=1e-4, atol=1e-3), (loss3, ref3)

    # 4) bf16 inputs on the native-dtype MXU path (auto tiles, single tile).
    imgs4 = _norm(jax.random.normal(k7, (256, 128), dtype=jnp.float32)).astype(jnp.bfloat16)
    caps4 = _norm(jax.random.normal(k8, (256, 128), dtype=jnp.float32)).astype(jnp.bfloat16)
    loss4 = jax.block_until_ready(hard_negative_contrastive_loss(imgs4, caps4))
    ref4 = _reference_loss(imgs4.astype(jnp.float32), caps4.astype(jnp.float32))
    assert jnp.allclose(loss4, ref4, rtol=1e-3, atol=1e-2), (loss4, ref4)

    print("KERNEL_OK")
</pallas_src>

<mosaic_0001>
module attributes {stable_mosaic.version = 11 : i64} {
  func.func @_hncl_kernel(%arg0: i32, %arg1: i32, %arg2: memref<8x32xf32, #tpu.memory_space<vmem>>, %arg3: memref<8x32xf32, #tpu.memory_space<vmem>>, %arg4: memref<1x1x8xf32, #tpu.memory_space<vmem>>, %arg5: memref<1x1x8xf32, #tpu.memory_space<vmem>>, %arg6: memref<8x1xf32, #tpu.memory_space<vmem>>, %arg7: memref<8x1xf32, #tpu.memory_space<vmem>>) attributes {dimension_semantics = [#tpu.dimension_semantics<parallel>, #tpu.dimension_semantics<arbitrary>], iteration_bounds = array<i64: 1, 1>, scalar_prefetch = 0 : i64, scratch_operands = 1 : i64, tpu.core_type = #tpu.core_type<tc>, window_params = [{transform_indices = @transform_0, window_bounds = array<i64: 8, 32>}, {transform_indices = @transform_1, window_bounds = array<i64: 8, 32>}, {transform_indices = @transform_2, window_bounds = array<i64: 1, 1, 8>}, {transform_indices = @transform_3, window_bounds = array<i64: 1, 1, 8>}, {transform_indices = @transform_4, window_bounds = array<i64: 8, 1>}]} {
    %c0 = arith.constant 0 : index
    %c0_0 = arith.constant 0 : index
    %0 = vector.load %arg2[%c0, %c0_0] : memref<8x32xf32, #tpu.memory_space<vmem>>, vector<8x32xf32>
    %c0_1 = arith.constant 0 : index
    %c0_2 = arith.constant 0 : index
    %1 = vector.load %arg3[%c0_1, %c0_2] : memref<8x32xf32, #tpu.memory_space<vmem>>, vector<8x32xf32>
    %cst = arith.constant dense<0.000000e+00> : vector<8x8xf32>
    %2 = tpu.matmul %0, %1, %cst {dimension_numbers = #tpu.dot_dimension_numbers<[1], [1], [0], [0], [0, 0, 1, 0], [], []>} : vector<8x32xf32>, vector<8x32xf32>, vector<8x8xf32> -> vector<8x8xf32>
    %c0_i32 = arith.constant 0 : i32
    %3 = arith.cmpi eq, %arg1, %c0_i32 : i32
    %4 = arith.extui %3 : i1 to i32
    %c0_i32_3 = arith.constant 0 : i32
    %5 = arith.cmpi ne, %4, %c0_i32_3 : i32
    scf.if %5 {
      %cst_12 = arith.constant 0xFF800000 : f32
      %23 = vector.broadcast %cst_12 : f32 to vector<8x1xf32>
      %c0_13 = arith.constant 0 : index
      %c0_14 = arith.constant 0 : index
      %24 = vector.load %arg7[%c0_13, %c0_14] : memref<8x1xf32, #tpu.memory_space<vmem>>, vector<8x1xf32>
      tpu.vector_store %arg7[%c0_13, %c0_14], %23 {strides = array<i32>} : memref<8x1xf32, #tpu.memory_space<vmem>>, vector<8x1xf32>,
    } else {
    }
    %c8_i32 = arith.constant 8 : i32
    %6 = arith.muli %arg1, %c8_i32 : i32
    %c1_i32 = arith.constant 1 : i32
    %7 = arith.addi %arg0, %c1_i32 : i32
    %c8_i32_4 = arith.constant 8 : i32
    %8 = arith.muli %7, %c8_i32_4 : i32
    %9 = arith.cmpi slt, %6, %8 : i32
    %c8_i32_5 = arith.constant 8 : i32
    %10 = arith.muli %arg0, %c8_i32_5 : i32
    %c1_i32_6 = arith.constant 1 : i32
    %11 = arith.addi %arg1, %c1_i32_6 : i32
    %c8_i32_7 = arith.constant 8 : i32
    %12 = arith.muli %11, %c8_i32_7 : i32
    %13 = arith.cmpi slt, %10, %12 : i32
    %14 = arith.andi %9, %13 : i1
    %15 = arith.extui %14 : i1 to i32
    %c0_i32_8 = arith.constant 0 : i32
    %16 = arith.cmpi ne, %15, %c0_i32_8 : i32
    scf.if %16 {
      %c8_i32_12 = arith.constant 8 : i32
      %23 = arith.muli %arg0, %c8_i32_12 : i32
      %24 = tpu.iota {dimensions = array<i32: 0>} : vector<8x1xi32>
      %25 = vector.broadcast %23 : i32 to vector<8x1xi32>
      %26 = arith.addi %25, %24 : vector<8x1xi32>
      %c8_i32_13 = arith.constant 8 : i32
      %27 = arith.muli %arg1, %c8_i32_13 : i32
      %28 = tpu.iota {dimensions = array<i32: 1>} : vector<1x8xi32>
      %29 = vector.broadcast %27 : i32 to vector<1x8xi32>
      %30 = arith.addi %29, %28 : vector<1x8xi32>
      %31 = vector.broadcast %26 : vector<8x1xi32> to vector<8x8xi32>
      %32 = vector.broadcast %30 : vector<1x8xi32> to vector<8x8xi32>
      %33 = arith.cmpi eq, %31, %32 : vector<8x8xi32>
      %cst_14 = arith.constant 0.000000e+00 : f32
      %34 = vector.broadcast %cst_14 : f32 to vector<8x8xf32>
      %35 = arith.subf %34, %2 : vector<8x8xf32>
      %36 = arith.select %33, %35, %2 : vector<8x8xi1>, vector<8x8xf32>
      %c0_15 = arith.constant 0 : index
      %c0_16 = arith.constant 0 : index
      %37 = vector.load %arg7[%c0_15, %c0_16] : memref<8x1xf32, #tpu.memory_space<vmem>>, vector<8x1xf32>
      %cst_17 = arith.constant dense<0xFF800000> : vector<8xf32>
      %38 = vector.multi_reduction <maximumf>, %36, %cst_17 [1] : vector<8x8xf32> to vector<8xf32>
      %39 = vector.shape_cast %38 : vector<8xf32> to vector<8x1xf32>
      %40 = arith.maximumf %37, %39 : vector<8x1xf32>
      %c0_18 = arith.constant 0 : index
      %c0_19 = arith.constant 0 : index
      %41 = vector.load %arg7[%c0_18, %c0_19] : memref<8x1xf32, #tpu.memory_space<vmem>>, vector<8x1xf32>
      tpu.vector_store %arg7[%c0_18, %c0_19], %40 {strides = array<i32>} : memref<8x1xf32, #tpu.memory_space<vmem>>, vector<8x1xf32>,
      %cst_20 = arith.constant dense<0xFF800000> : vector<8xf32>
      %42 = vector.multi_reduction <maximumf>, %36, %cst_20 [0] : vector<8x8xf32> to vector<8xf32>
      %43 = vector.shape_cast %42 : vector<8xf32> to vector<1x8xf32>
      %c0_21 = arith.constant 0 : index
      %c0_22 = arith.constant 0 : index
      %c0_23 = arith.constant 0 : index
      %44 = vector.load %arg4[%c0_21, %c0_22, %c0_23] : memref<1x1x8xf32, #tpu.memory_space<vmem>>, vector<1x1x8xf32>
      %45 = vector.shape_cast %44 : vector<1x1x8xf32> to vector<1x8xf32>
      %46 = vector.shape_cast %43 : vector<1x8xf32> to vector<1x1x8xf32>
      tpu.vector_store %arg4[%c0_21, %c0_22, %c0_23], %46 {strides = array<i32>} : memref<1x1x8xf32, #tpu.memory_space<vmem>>, vector<1x1x8xf32>,
      %cst_24 = arith.constant 0.000000e+00 : f32
      %47 = vector.broadcast %cst_24 : f32 to vector<8x8xf32>
      %48 = arith.select %33, %2, %47 : vector<8x8xi1>, vector<8x8xf32>
      %cst_25 = arith.constant dense<0.000000e+00> : vector<8xf32>
      %49 = vector.multi_reduction <add>, %48, %cst_25 [0] : vector<8x8xf32> to vector<8xf32>
      %50 = vector.shape_cast %49 : vector<8xf32> to vector<1x8xf32>
      %c0_26 = arith.constant 0 : index
      %c0_27 = arith.constant 0 : index
      %c0_28 = arith.constant 0 : index
      %51 = vector.load %arg5[%c0_26, %c0_27, %c0_28] : memref<1x1x8xf32, #tpu.memory_space<vmem>>, vector<1x1x8xf32>
      %52 = vector.shape_cast %51 : vector<1x1x8xf32> to vector<1x8xf32>
      %53 = vector.shape_cast %50 : vector<1x8xf32> to vector<1x1x8xf32>
      tpu.vector_store %arg5[%c0_26, %c0_27, %c0_28], %53 {strides = array<i32>} : memref<1x1x8xf32, #tpu.memory_space<vmem>>, vector<1x1x8xf32>,
    } else {
    }
    %true = arith.constant true
    %17 = arith.xori %14, %true : i1
    %18 = arith.extui %17 : i1 to i32
    %c0_i32_9 = arith.constant 0 : i32
    %19 = arith.cmpi ne, %18, %c0_i32_9 : i32
    scf.if %19 {
      %c0_12 = arith.constant 0 : index
      %c0_13 = arith.constant 0 : index
      %23 = vector.load %arg7[%c0_12, %c0_13] : memref<8x1xf32, #tpu.memory_space<vmem>>, vector<8x1xf32>
      %cst_14 = arith.constant dense<0xFF800000> : vector<8xf32>
      %24 = vector.multi_reduction <maximumf>, %2, %cst_14 [1] : vector<8x8xf32> to vector<8xf32>
      %25 = vector.shape_cast %24 : vector<8xf32> to vector<8x1xf32>
      %26 = arith.maximumf %23, %25 : vector<8x1xf32>
      %c0_15 = arith.constant 0 : index
      %c0_16 = arith.constant 0 : index
      %27 = vector.load %arg7[%c0_15, %c0_16] : memref<8x1xf32, #tpu.memory_space<vmem>>, vector<8x1xf32>
      tpu.vector_store %arg7[%c0_15, %c0_16], %26 {strides = array<i32>} : memref<8x1xf32, #tpu.memory_space<vmem>>, vector<8x1xf32>,
      %cst_17 = arith.constant dense<0xFF800000> : vector<8xf32>
      %28 = vector.multi_reduction <maximumf>, %2, %cst_17 [0] : vector<8x8xf32> to vector<8xf32>
      %29 = vector.shape_cast %28 : vector<8xf32> to vector<1x8xf32>
      %c0_18 = arith.constant 0 : index
      %c0_19 = arith.constant 0 : index
      %c0_20 = arith.constant 0 : index
      %30 = vector.load %arg4[%c0_18, %c0_19, %c0_20] : memref<1x1x8xf32, #tpu.memory_space<vmem>>, vector<1x1x8xf32>
      %31 = vector.shape_cast %30 : vector<1x1x8xf32> to vector<1x8xf32>
      %32 = vector.shape_cast %29 : vector<1x8xf32> to vector<1x1x8xf32>
      tpu.vector_store %arg4[%c0_18, %c0_19, %c0_20], %32 {strides = array<i32>} : memref<1x1x8xf32, #tpu.memory_space<vmem>>, vector<1x1x8xf32>,
      %cst_21 = arith.constant 0.000000e+00 : f32
      %33 = vector.broadcast %cst_21 : f32 to vector<1x8xf32>
      %c0_22 = arith.constant 0 : index
      %c0_23 = arith.constant 0 : index
      %c0_24 = arith.constant 0 : index
      %34 = vector.load %arg5[%c0_22, %c0_23, %c0_24] : memref<1x1x8xf32, #tpu.memory_space<vmem>>, vector<1x1x8xf32>
      %35 = vector.shape_cast %34 : vector<1x1x8xf32> to vector<1x8xf32>
      %36 = vector.shape_cast %33 : vector<1x8xf32> to vector<1x1x8xf32>
      tpu.vector_store %arg5[%c0_22, %c0_23, %c0_24], %36 {strides = array<i32>} : memref<1x1x8xf32, #tpu.memory_space<vmem>>, vector<1x1x8xf32>,
    } else {
    }
    %c0_i32_10 = arith.constant 0 : i32
    %20 = arith.cmpi eq, %arg1, %c0_i32_10 : i32
    %21 = arith.extui %20 : i1 to i32
    %c0_i32_11 = arith.constant 0 : i32
    %22 = arith.cmpi ne, %21, %c0_i32_11 : i32
    scf.if %22 {
      %c0_12 = arith.constant 0 : index
      %c0_13 = arith.constant 0 : index
      %23 = vector.load %arg7[%c0_12, %c0_13] : memref<8x1xf32, #tpu.memory_space<vmem>>, vector<8x1xf32>
      %c0_14 = arith.constant 0 : index
      %c0_15 = arith.constant 0 : index
      %24 = vector.load %arg6[%c0_14, %c0_15] : memref<8x1xf32, #tpu.memory_space<vmem>>, vector<8x1xf32>
      tpu.vector_store %arg6[%c0_14, %c0_15], %23 {strides = array<i32>} : memref<8x1xf32, #tpu.memory_space<vmem>>, vector<8x1xf32>,
    } else {
    }
    return
  }
  func.func @transform_0(%arg0: i32, %arg1: i32) -> (i32, i32) {
    %c0_i32 = arith.constant 0 : i32
    %c0_i32_0 = arith.constant 0 : i32
    return %arg0, %c0_i32 : i32, i32
  }
  func.func @transform_1(%arg0: i32, %arg1: i32) -> (i32, i32) {
    %c0_i32 = arith.constant 0 : i32
    %c0_i32_0 = arith.constant 0 : i32
    return %arg1, %c0_i32 : i32, i32
  }
  func.func @transform_2(%arg0: i32, %arg1: i32) -> (i32, i32, i32) {
    %c0_i32 = arith.constant 0 : i32
    %c0_i32_0 = arith.constant 0 : i32
    return %arg0, %c0_i32, %arg1 : i32, i32, i32
  }
  func.func @transform_3(%arg0: i32, %arg1: i32) -> (i32, i32, i32) {
    %c0_i32 = arith.constant 0 : i32
    %c0_i32_0 = arith.constant 0 : i32
    return %arg0, %c0_i32, %arg1 : i32, i32, i32
  }
  func.func @transform_4(%arg0: i32, %arg1: i32) -> (i32, i32) {
    %c0_i32 = arith.constant 0 : i32
    %c0_i32_0 = arith.constant 0 : i32
    return %arg0, %c0_i32 : i32, i32
  }
}

</mosaic_0001>

<llo_original>
// kernel: tpu_custom_call.1
$region0: #{tpu_custom_call.1}
  #allocation0 [shape = 'u32[]', space=smem, size = 0x4, offset = 0x4, fixed_abs, tag = 'smem constant byte address 0x4 - core index']
  #allocation1 [shape = 'u32[144,128]{1,0:T(1,128)}', space=vmem, size = 0x12000, scoped, tag = 'internal scratch']
  #allocation2 [shape = 'f32[8,1]{1,0:T(8,128)}', space=vmem, size = 0x1000, scoped, tag = 'scratch operand']
  %s0 = inlined_call_operand.hbm [shape: f32[8,32], index: 0, kind: input, shape index: {}]
  %s1 = inlined_call_operand.hbm [shape: f32[8,32], index: 1, kind: input, shape index: {}]
  %s2 = inlined_call_operand.hbm [shape: f32[1,1,8], index: 2, kind: output, shape index: {0}]
  %s3 = inlined_call_operand.hbm [shape: f32[1,1,8], index: 3, kind: output, shape index: {1}]
  %s4 = inlined_call_operand.vmem [shape: f32[8,1], index: 4, kind: output, shape index: {2}]
  %5 = xla_tuple %s2, %s3, %s4
  %s6 = sld [smem:[#allocation0]]
  $region58: #{tpu_custom_call.1} parent=0
    _
  %s8 = ssub.s32 1, %s6
  %s9 = scalar_select 0, %s8, %s6
  $region1: #{tpu_custom_call.1} parent=0
    #allocation3 [shape = 'u8[4096]{0}', space=vmem, size = 0x1000, scoped, tag = 'input window, operand 0, single buffered']
    #allocation4 [shape = 's32[1]{0}', space=sflag, size = 0x4, scoped, tag = 'scoped memory for tpu_custom_call.1']
    #allocation5 [shape = 's32[1]{0}', space=sflag, size = 0x4, scoped, tag = 'scoped memory for tpu_custom_call.1']
    #allocation6 [shape = 'u8[4096]{0}', space=vmem, size = 0x1000, scoped, tag = 'input window, operand 1, single buffered']
    #allocation7 [shape = 's32[1]{0}', space=sflag, size = 0x4, scoped, tag = 'scoped memory for tpu_custom_call.1']
    #allocation8 [shape = 'u8[512]{0}', space=vmem, size = 0x400, scoped, tag = 'output window, operand 0, single buffered']
    #allocation9 [shape = 'u8[512]{0}', space=vmem, size = 0x400, scoped, tag = 'output window, operand 1, single buffered']
    #allocation10 [shape = 's32[1]{0}', space=sflag, size = 0x4, scoped, tag = 'scoped memory for tpu_custom_call.1']
    %10 = vsyncpa [#allocation4], 0
    %11 = vsyncpa [#allocation7], 0
    %12 = vsyncpa [#allocation5], 0
    %13 = vsyncpa [#allocation10], 0
    // Predicated region
    $region2: #{tpu_custom_call.1} parent=1 // pred_check
      _
    $region3: #{tpu_custom_call.1} parent=1 // pred_check_branch
      %15 = sbr.rel (0) target = $region5
    $region4: #{tpu_custom_call.1} parent=1 // pred_region
      %s17 = ssub.s32 128, 128
      %18 = vsyncadd [#allocation4], %s17
      %s20 = sshll.u32 [#allocation3], 4
      %s21 = int_to_ptr.vmem [resolvable:$true] %s20
      %23 = dma.hbm_to_vmem [thread:$0]  %s0, 128, %s21, [#allocation4]
    $region5: #{tpu_custom_call.1} parent=1 // pred_fallthru
      _
    // Predicated region
    $region6: #{tpu_custom_call.1} parent=1 // pred_check
      _
    $region7: #{tpu_custom_call.1} parent=1 // pred_check_branch
      %25 = sbr.rel (0) target = $region9
    $region8: #{tpu_custom_call.1} parent=1 // pred_region
      %s27 = ssub.s32 128, 128
      %28 = vsyncadd [#allocation7], %s27
      %s30 = sshll.u32 [#allocation6], 4
      %s31 = int_to_ptr.vmem [resolvable:$true] %s30
      %33 = dma.hbm_to_vmem [thread:$0]  %s1, 128, %s31, [#allocation7]
    $region9: #{tpu_custom_call.1} parent=1 // pred_fallthru
      _
    // Predicated region
    $region10: #{tpu_custom_call.1} parent=1 // pred_check
      _
    $region11: #{tpu_custom_call.1} parent=1 // pred_check_branch
      %35 = sbr.rel (0) target = $region13
    $region12: #{tpu_custom_call.1} parent=1 // pred_region
      %36 = dma.done [#allocation4], 128
    $region13: #{tpu_custom_call.1} parent=1 // pred_fallthru
      _
    // Predicated region
    $region14: #{tpu_custom_call.1} parent=1 // pred_check
      _
    $region15: #{tpu_custom_call.1} parent=1 // pred_check_branch
      %38 = sbr.rel (0) target = $region17
    $region16: #{tpu_custom_call.1} parent=1 // pred_region
      %39 = dma.done [#allocation7], 128
    $region17: #{tpu_custom_call.1} parent=1 // pred_fallthru
      _
    %v40 = vld [vmem:[#allocation3] sm:$0xff]
    %v41 = vld [vmem:[#allocation6] sm:$0xff]
    %vm42 = vcmask 261120
    %v44 = vsel %vm42, %v40, 0
    %v47 = vsel %vm42, %v41, 0
    %49 = vmatprep.subr.mxu0 0.0
    %50 = vmatpush1.xpose.msra.mxu0 0.0
    %51 = vmatprep.subr.mxu0 0.0
    %52 = vmatpush1.xpose.msra.mxu0 0.0
    %53 = vmatprep.subr.mxu0 0.0
    %54 = vmatpush1.xpose.msra.mxu0 0.0
    %55 = vmatprep.subr.mxu0 0.0
    %56 = vmatpush1.xpose.msra.mxu0 0.0
    %57 = vmatprep.subr.mxu0 0.0
    %58 = vmatpush1.xpose.msra.mxu0 0.0
    %59 = vmatprep.subr.mxu0 0.0
    %60 = vmatpush1.xpose.msra.mxu0 0.0
    %61 = vmatprep.subr.mxu0 0.0
    %62 = vmatpush1.xpose.msra.mxu0 0.0
    %63 = vmatprep.subr.mxu0 0.0
    %64 = vmatpush1.xpose.msra.mxu0 0.0
    %65 = vmatprep.subr.mxu0 0.0
    %66 = vmatpush1.xpose.msra.mxu0 0.0
    %67 = vmatprep.subr.mxu0 0.0
    %68 = vmatpush1.xpose.msra.mxu0 0.0
    %69 = vmatprep.subr.mxu0 0.0
    %70 = vmatpush1.xpose.msra.mxu0 0.0
    %71 = vmatprep.subr.mxu0 0.0
    %72 = vmatpush1.xpose.msra.mxu0 0.0
    %73 = vmatprep.subr.mxu0 0.0
    %74 = vmatpush1.xpose.msra.mxu0 0.0
    %75 = vmatprep.subr.mxu0 0.0
    %76 = vmatpush1.xpose.msra.mxu0 0.0
    %77 = vmatprep.subr.mxu0 0.0
    %78 = vmatpush1.xpose.msra.mxu0 0.0
    %79 = vmatprep.subr.mxu0 0.0
    %80 = vmatpush1.xpose.msra.mxu0 %v47
    %81 = vmatprep.subr.mxu0 0.0
    %82 = vmatpush2.xpose.msra.mxu0 0.0
    %83 = vmatprep.subr.mxu0 0.0
    %84 = vmatpush2.xpose.msra.mxu0 0.0
    %85 = vmatprep.subr.mxu0 0.0
    %86 = vmatpush2.xpose.msra.mxu0 0.0
    %87 = vmatprep.subr.mxu0 0.0
    %88 = vmatpush2.xpose.msra.mxu0 0.0
    %89 = vmatprep.subr.mxu0 0.0
    %90 = vmatpush2.xpose.msra.mxu0 0.0
    %91 = vmatprep.subr.mxu0 0.0
    %92 = vmatpush2.xpose.msra.mxu0 0.0
    %93 = vmatprep.subr.mxu0 0.0
    %94 = vmatpush2.xpose.msra.mxu0 0.0
    %95 = vmatprep.subr.mxu0 0.0
    %96 = vmatpush2.xpose.msra.mxu0 0.0
    %97 = vmatprep.subr.mxu0 0.0
    %98 = vmatpush2.xpose.msra.mxu0 0.0
    %99 = vmatprep.subr.mxu0 0.0
    %100 = vmatpush2.xpose.msra.mxu0 0.0
    %101 = vmatprep.subr.mxu0 0.0
    %102 = vmatpush2.xpose.msra.mxu0 0.0
    %103 = vmatprep.subr.mxu0 0.0
    %104 = vmatpush2.xpose.msra.mxu0 0.0
    %105 = vmatprep.subr.mxu0 0.0
    %106 = vmatpush2.xpose.msra.mxu0 0.0
    %107 = vmatprep.subr.mxu0 0.0
    %108 = vmatpush2.xpose.msra.mxu0 0.0
    %109 = vmatprep.subr.mxu0 0.0
    %110 = vmatpush2.xpose.msra.mxu0 0.0
    %111 = vmatprep.subr.mxu0 0.0
    %112 = vmatpush2.xpose.msra.mxu0 0.0
    %113 = vmatprep.mubr.f32.mxu0 0.0
    %114 = vmatmul.mubr.f32.gmra.mxu0 %v44
    %v115 = vpop.f32.mrf.mxu0
    %v116 = vadd.f32 0.0, %v115
    %v117 = vpop.f32.mrf.mxu0
    %118 = vdwg.mxu0
    %p119 = scmp.eq.s32.totalorder 0, 0
    // Predicated region
    $region18: #{tpu_custom_call.1} parent=1 // pred_check
      %p120 = pneg %p119
    $region19: #{tpu_custom_call.1} parent=1 // pred_check_branch
      %122 = sbr.rel (%p120) target = $region21
    $region20: #{tpu_custom_call.1} parent=1 // pred_region
      %vm123 = vcmask 7168
      %124 = vst.msk [vmem:[#allocation2] sm:$0xff] %vm123, -inf
    $region21: #{tpu_custom_call.1} parent=1 // pred_fallthru
      _
    %s125 = smul.u32 0, 8
    %s126 = sadd.s32 0, 1
    %s127 = smul.u32 %s126, 8
    %p128 = scmp.lt.s32.totalorder %s125, %s127
    %s129 = smul.u32 0, 8
    %s130 = sadd.s32 0, 1
    %s131 = smul.u32 %s130, 8
    %p132 = scmp.lt.s32.totalorder %s129, %s131
    %p133 = pnand %p128, %p132
    %p134 = pneg %p133
    // Predicated region
    $region22: #{tpu_custom_call.1} parent=1 // pred_check
      _
    $region23: #{tpu_custom_call.1} parent=1 // pred_check_branch
      %136 = sbr.rel (%p133) target = $region25
    $region24: #{tpu_custom_call.1} parent=1 // pred_region
      %v137 = vlaneseq
      %v138 = vshrl.u32 %v137, 7
      %v139 = vstv %s129
      %v140 = vadd.s32 %v139, %v138
      %v141 = vlaneseq
      %v142 = vand.u32 %v141, 127
      %v143 = vstv %s125
      %v144 = vadd.s32 %v143, %v142
      %vm145 = vcmp.eq.s32.totalorder %v140, %v144
      %v146 = vsub.f32 0.0, %v116
      %v147 = vsel %vm145, %v146, %v116
      %v148 = vld [vmem:[#allocation2] sm:$0xff]
      %vm149 = vcmask 64512
      %v150 = vsel %vm149, %v147, -inf
      %151 = vmax.xlane.f32.xlu0 %v150
      %v152 = vpop.xlane.xlu0 %151
      %v153 = vmax.f32 %v148, %v152
      %vm154 = vcmask 7168
      %155 = vst.msk [vmem:[#allocation2] sm:$0xff] %vm154, %v153
      %v156 = vrot.slane %v150, 4
      %v157 = vmax.f32 %v150, %v156
      %v158 = vrot.slane %v157, 2
      %v159 = vmax.f32 %v157, %v158
      %v160 = vrot.slane %v159, 1
      %v161 = vmax.f32 %v159, %v160
      %vm162 = vcmask 57344
      %163 = vst.msk [vmem:[#allocation8] sm:$0x1] %vm162, %v161
      %v164 = vsel %vm145, %v116, 0.0
      %v165 = vsel %vm149, %v164, 0.0
      %v166 = vrot.slane %v165, 4
      %v167 = vadd.f32 %v165, %v166
      %v168 = vrot.slane %v167, 2
      %v169 = vadd.f32 %v167, %v168
      %v170 = vrot.slane %v169, 1
      %v171 = vadd.f32 %v169, %v170
      %172 = vst.msk [vmem:[#allocation9] sm:$0x1] %vm162, %v171
    $region25: #{tpu_custom_call.1} parent=1 // pred_fallthru
      _
    %p173 = pneg %p134
    // Predicated region
    $region26: #{tpu_custom_call.1} parent=1 // pred_check
      _
    $region27: #{tpu_custom_call.1} parent=1 // pred_check_branch
      %175 = sbr.rel (%p134) target = $region29
    $region28: #{tpu_custom_call.1} parent=1 // pred_region
      %v176 = vld [vmem:[#allocation2] sm:$0xff]
      %vm177 = vcmask 64512
      %v178 = vsel %vm177, %v116, -inf
      %179 = vmax.xlane.f32.xlu0 %v178
      %v180 = vpop.xlane.xlu0 %179
      %v181 = vmax.f32 %v176, %v180
      %vm182 = vcmask 7168
      %183 = vst.msk [vmem:[#allocation2] sm:$0xff] %vm182, %v181
      %v184 = vrot.slane %v178, 4
      %v185 = vmax.f32 %v178, %v184
      %v186 = vrot.slane %v185, 2
      %v187 = vmax.f32 %v185, %v186
      %v188 = vrot.slane %v187, 1
      %v189 = vmax.f32 %v187, %v188
      %vm190 = vcmask 57344
      %191 = vst.msk [vmem:[#allocation8] sm:$0x1] %vm190, %v189
      %192 = vst.msk [vmem:[#allocation9] sm:$0x1] %vm190, 0.0
    $region29: #{tpu_custom_call.1} parent=1 // pred_fallthru
      _
    // Predicated region
    $region30: #{tpu_custom_call.1} parent=1 // pred_check
      %p193 = pneg %p119
    $region31: #{tpu_custom_call.1} parent=1 // pred_check_branch
      %195 = sbr.rel (%p193) target = $region33
    $region32: #{tpu_custom_call.1} parent=1 // pred_region
      %v196 = vld [vmem:[#allocation2] sm:$0xff]
      %vm197 = vcmask 7168
      %198 = vst.msk [vmem:[%s4] sm:$0xff] %vm197, %v196
    $region33: #{tpu_custom_call.1} parent=1 // pred_fallthru
      _
    // Predicated region
    $region34: #{tpu_custom_call.1} parent=1 // pred_check
      _
    $region35: #{tpu_custom_call.1} parent=1 // pred_check_branch
      %200 = sbr.rel (0) target = $region37
    $region36: #{tpu_custom_call.1} parent=1 // pred_region
      %s202 = ssub.s32 16, 16
      %203 = vsyncadd [#allocation5], %s202
      %s205 = sshll.u32 [#allocation8], 4
      %s206 = int_to_ptr.vmem [resolvable:$true] %s205
      %208 = dma.vmem_to_hbm [thread:$0]  %s206, 16, %s2, [#allocation5]
    $region37: #{tpu_custom_call.1} parent=1 // pred_fallthru
      _
    // Predicated region
    $region38: #{tpu_custom_call.1} parent=1 // pred_check
      _
    $region39: #{tpu_custom_call.1} parent=1 // pred_check_branch
      %210 = sbr.rel (0) target = $region41
    $region40: #{tpu_custom_call.1} parent=1 // pred_region
      %s212 = ssub.s32 16, 16
      %213 = vsyncadd [#allocation10], %s212
      %s215 = sshll.u32 [#allocation9], 4
      %s216 = int_to_ptr.vmem [resolvable:$true] %s215
      %218 = dma.vmem_to_hbm [thread:$0]  %s216, 16, %s3, [#allocation10]
    $region41: #{tpu_custom_call.1} parent=1 // pred_fallthru
      _
    // Predicated region
    $region42: #{tpu_custom_call.1} parent=1 // pred_check
      _
    $region43: #{tpu_custom_call.1} parent=1 // pred_check_branch
      %220 = sbr.rel (0) target = $region45
    $region44: #{tpu_custom_call.1} parent=1 // pred_region
      _
    $region45: #{tpu_custom_call.1} parent=1 // pred_fallthru
      _
    // Predicated region
    $region46: #{tpu_custom_call.1} parent=1 // pred_check
      _
    $region47: #{tpu_custom_call.1} parent=1 // pred_check_branch
      %222 = sbr.rel (0) target = $region49
    $region48: #{tpu_custom_call.1} parent=1 // pred_region
      %223 = dma.done [#allocation5], 16
    $region49: #{tpu_custom_call.1} parent=1 // pred_fallthru
      _
    // Predicated region
    $region50: #{tpu_custom_call.1} parent=1 // pred_check
      _
    $region51: #{tpu_custom_call.1} parent=1 // pred_check_branch
      %225 = sbr.rel (0) target = $region53
    $region52: #{tpu_custom_call.1} parent=1 // pred_region
      %226 = dma.done [#allocation10], 16
    $region53: #{tpu_custom_call.1} parent=1 // pred_fallthru
      _
    // Predicated region
    $region54: #{tpu_custom_call.1} parent=1 // pred_check
      _
    $region55: #{tpu_custom_call.1} parent=1 // pred_check_branch
      %228 = sbr.rel (0) target = $region57
    $region56: #{tpu_custom_call.1} parent=1 // pred_region
      _
    $region57: #{tpu_custom_call.1} parent=1 // pred_fallthru
      _
    %229 = vsyncpa [#allocation4], 1
    %230 = vsyncpa [#allocation7], 1
    %231 = vsyncpa [#allocation5], 1
    %232 = vsyncpa [#allocation10], 1

</llo_original>
